<compile_context>
chip_gen: v7x
topology: tpu7x:2x2x1
jax: 0.10.0
libtpu: 0.0.40
codegen_flags: <defaults>
</compile_context>

<pallas_src>
import functools

import jax
import jax.numpy as jnp
from jax.experimental import pallas as pl
from jax.experimental.pallas import tpu as pltpu


def _ext_attn_kernel(x_ref, wqk_ref, mv_ref, o_ref, *, bb, n, compute_dtype):
    S = wqk_ref.shape[1]

    # Cast x in-kernel (f32 travels HBM->VMEM once; no wrapper cast pass).
    x = x_ref[...].astype(compute_dtype)                           # (rows, D) bf16

    # Fused projection: logits = x @ (Wq^T @ Mk^T). One fat MXU matmul, f32 acc.
    logits = jnp.dot(x, wqk_ref[...],
                     preferred_element_type=jnp.float32)           # (rows, S) f32
    logits = logits.reshape(bb, n, S)

    # Softmax over the sequence axis (PyTorch nn.Softmax(dim=1) on (B, N, S)).
    # Correct because every block spans the full N of each batch it contains.
    m = jnp.max(logits, axis=1, keepdims=True)
    e = jnp.exp(logits - m)
    attn = e * pl.reciprocal(jnp.sum(e, axis=1, keepdims=True), approx=True)

    # L1 normalization over S (F.normalize(p=1, dim=2), eps=1e-12). Softmax
    # output is non-negative so abs() is dropped; exact divide here avoids
    # compounding two approx reciprocals (it is off the critical path).
    l1 = jnp.maximum(jnp.sum(attn, axis=2, keepdims=True), 1e-12)
    attn = attn / l1

    # dropout(p=0.0) is the identity -> skipped.

    # Value projection (attn @ Mv^T), second fat MXU matmul.
    out = jnp.dot(attn.reshape(bb * n, S).astype(mv_ref.dtype), mv_ref[...],
                  preferred_element_type=jnp.float32)              # (rows, D) f32
    o_ref[...] = out.astype(o_ref.dtype)


def _vmem_capacity_bytes():
    try:
        return int(pltpu.get_tpu_info().vmem_capacity_bytes)
    except Exception:
        return 64 * 1024 * 1024        # conservative (v7x-sized) fallback


def _num_tensorcores():
    try:
        return max(1, int(getattr(jax.devices()[0], "num_cores", 1)))
    except Exception:
        return 1


def _pick_block_batch(B, N, D, S, x_isz, out_isz, *, target_rows,
                      act_budget_bytes, min_grid_steps):
    """Largest feasible BB (divisor of B) whose per-step blocks fit VMEM,
    preferring enough grid steps for every TensorCore and 16-row alignment."""

    def step_bytes(rows):
        return (2 * rows * D * x_isz        # x block, double-buffered (f32)
                + 2 * rows * D * out_isz    # out block, double-buffered
                + rows * D * 2              # in-kernel bf16 copy of x
                + 3 * rows * S * 4)         # f32 logits/attn temporaries

    feasible = []
    for bb in range(1, B + 1):
        if B % bb:
            continue
        rows = bb * N
        # (8,128) constraint: block rows must be a multiple of 8 unless the
        # block covers the whole flattened array.
        if rows % 8 != 0 and bb != B:
            continue
        if rows <= max(target_rows, N) and step_bytes(rows) <= act_budget_bytes:
            feasible.append(bb)
    if not feasible:
        feasible = [1]

    def score(bb):
        rows = bb * N
        steps = B // bb
        return (steps >= min_grid_steps,   # keep every TC pipelined
                rows % 16 == 0,            # bf16 sublane packing
                rows)                      # then: as big as possible
    return max(feasible, key=score)


def precompute_fused_weights(wq, mk, mv, compute_dtype=jnp.bfloat16):
    """Weight-only precompute; hoist out of the per-forward path in real use.

    wq: (D, D)  nn.Linear(d_model, d_model).weight  (out, in)
    mk: (S, D)  nn.Linear(d_model, S).weight
    mv: (D, S)  nn.Linear(S, d_model).weight
    """
    # Single rounding of the fused f32 product to bf16 (wider dynamic range
    # than running the two projections separately in bf16).
    wqk = jnp.dot(wq.T.astype(jnp.float32),
                  mk.T.astype(jnp.float32)).astype(compute_dtype)    # (D, S)
    mv_t = mv.T.astype(compute_dtype)                                # (S, D)
    return wqk, mv_t


def external_attention_fused(x, wqk, mv_t, *, compute_dtype=jnp.bfloat16,
                             out_dtype=None, target_rows=4096):
    """x: (B, N, D) float32; wqk: (D, S); mv_t: (S, D) (from precompute)."""
    B, N, D = x.shape
    S = wqk.shape[1]
    out_dtype = x.dtype if out_dtype is None else jnp.dtype(out_dtype)

    vmem_cap = _vmem_capacity_bytes()
    act_budget = int(vmem_cap * 0.55)
    vmem_limit = max(32 << 20, min(int(vmem_cap * 0.85), vmem_cap - (6 << 20)))

    n_cores = _num_tensorcores()
    min_steps = 2 * n_cores if n_cores > 1 else 1   # >=2 steps/core only if multicore

    x_isz = jnp.dtype(x.dtype).itemsize
    out_isz = jnp.dtype(out_dtype).itemsize
    BB = _pick_block_batch(B, N, D, S, x_isz, out_isz,
                           target_rows=target_rows,
                           act_budget_bytes=act_budget,
                           min_grid_steps=min_steps)
    rows = BB * N
    grid = (B // BB,)

    # Softmax over N requires every block to consist of whole batches.
    assert rows % N == 0 and (B * N) % rows == 0, "block must span full N"

    # Flatten (B, N) -> sublane-dense 2-D slabs (free, contiguous reshape).
    x2 = x.reshape(B * N, D)

    kernel = functools.partial(_ext_attn_kernel, bb=BB, n=N,
                               compute_dtype=compute_dtype)

    cost = pl.CostEstimate(
        flops=4 * B * N * D * S,
        transcendentals=B * N * S,
        bytes_accessed=(B * N * D * (x_isz + out_isz)
                        + 2 * D * S * jnp.dtype(compute_dtype).itemsize),
    )

    out2 = pl.pallas_call(
        kernel,
        out_shape=jax.ShapeDtypeStruct((B * N, D), out_dtype),
        grid_spec=pltpu.PrefetchScalarGridSpec(
            num_scalar_prefetch=0,
            grid=grid,
            in_specs=[
                pl.BlockSpec((rows, D), lambda b: (b, 0)),   # x slab (f32 in HBM)
                pl.BlockSpec((D, S), lambda b: (0, 0)),      # fused Wq^T @ Mk^T
                pl.BlockSpec((S, D), lambda b: (0, 0)),      # Mv^T
            ],
            out_specs=pl.BlockSpec((rows, D), lambda b: (b, 0)),
        ),
        compiler_params=pltpu.CompilerParams(
            dimension_semantics=("parallel",),
            vmem_limit_bytes=vmem_limit,
        ),
        cost_estimate=cost,
    )(x2, wqk, mv_t)

    return out2.reshape(B, N, D)


def external_attention(x, wq, mk, mv, *, compute_dtype=jnp.bfloat16,
                       out_dtype=None, target_rows=4096):
    """Convenience wrapper; for repeated calls hoist precompute_fused_weights."""
    wqk, mv_t = precompute_fused_weights(wq, mk, mv, compute_dtype)
    return external_attention_fused(x, wqk, mv_t, compute_dtype=compute_dtype,
                                    out_dtype=out_dtype, target_rows=target_rows)


def external_attention_ref(x, wq, mk, mv):
    """Pure-JAX f32 reference mirroring the PyTorch forward."""
    q = jnp.einsum("bnd,ed->bne", x, wq)          # Linear: x @ Wq^T
    attn = jnp.einsum("bnd,sd->bns", q, mk)       # q @ Mk^T
    attn = jax.nn.softmax(attn, axis=1)           # softmax over seq axis
    denom = jnp.maximum(jnp.sum(jnp.abs(attn), axis=2, keepdims=True), 1e-12)
    attn = attn / denom                           # F.normalize(p=1, dim=2)
    return jnp.einsum("bns,ds->bnd", attn, mv)    # attn @ Mv^T


if __name__ == "__main__":
    # d_model=128 keeps the output lane-dense (multiple of 128); S=64 is the
    # module default external-memory size.
    B, N, D, S = 4, 8, 128, 64

    key = jax.random.PRNGKey(0)
    kx, kq, kk, kv = jax.random.split(key, 4)

    x = jax.random.normal(kx, (B, N, D), dtype=jnp.float32)
    # Deterministic "Linear" weights (shapes match nn.Linear(out, in) storage).
    wq = jax.random.normal(kq, (D, D), dtype=jnp.float32) * 0.1
    mk = jax.random.normal(kk, (S, D), dtype=jnp.float32) * 0.1
    mv = jax.random.normal(kv, (D, S), dtype=jnp.float32) * 0.1

    out = jax.block_until_ready(external_attention(x, wq, mk, mv))
    ref = external_attention_ref(x, wq, mk, mv)

    assert out.shape == (B, N, D)
    max_err = float(jnp.max(jnp.abs(out - ref)))
    # bf16 MXU inputs + approx EUP reciprocal in the softmax -> tolerance
    # looser than pure f32.
    assert jnp.allclose(out, ref, atol=3e-3, rtol=3e-2), (
        f"mismatch vs reference (max abs err {max_err})")

    print("KERNEL_OK")
</pallas_src>

<mosaic_0001>
module attributes {stable_mosaic.version = 11 : i64} {
  func.func @_ext_attn_kernel(%arg0: i32, %arg1: memref<32x128xf32, #tpu.memory_space<vmem>>, %arg2: memref<128x64xbf16, #tpu.memory_space<vmem>>, %arg3: memref<64x128xbf16, #tpu.memory_space<vmem>>, %arg4: memref<32x128xf32, #tpu.memory_space<vmem>>) attributes {dimension_semantics = [#tpu.dimension_semantics<parallel>], iteration_bounds = array<i64: 1>, scalar_prefetch = 0 : i64, scratch_operands = 0 : i64, tpu.core_type = #tpu.core_type<tc>, window_params = [{transform_indices = @transform_0, window_bounds = array<i64: 32, 128>}, {pipeline_mode = #tpu.pipeline_mode<synchronous>, transform_indices = @transform_1, window_bounds = array<i64: 128, 64>}, {pipeline_mode = #tpu.pipeline_mode<synchronous>, transform_indices = @transform_2, window_bounds = array<i64: 64, 128>}, {transform_indices = @transform_3, window_bounds = array<i64: 32, 128>}]} {
    %c0 = arith.constant 0 : index
    %c0_0 = arith.constant 0 : index
    %0 = vector.load %arg1[%c0, %c0_0] : memref<32x128xf32, #tpu.memory_space<vmem>>, vector<32x128xf32>
    %1 = arith.truncf %0 : vector<32x128xf32> to vector<32x128xbf16>
    %c0_1 = arith.constant 0 : index
    %c0_2 = arith.constant 0 : index
    %2 = vector.load %arg2[%c0_1, %c0_2] : memref<128x64xbf16, #tpu.memory_space<vmem>>, vector<128x64xbf16>
    %cst = arith.constant dense<0.000000e+00> : vector<32x64xf32>
    %3 = tpu.matmul %1, %2, %cst {dimension_numbers = #tpu.dot_dimension_numbers<[1], [0], [0], [1], [0, 0, 1, 1], [], []>} : vector<32x128xbf16>, vector<128x64xbf16>, vector<32x64xf32> -> vector<32x64xf32>
    %4 = vector.shape_cast %3 : vector<32x64xf32> to vector<4x8x64xf32>
    %cst_3 = arith.constant dense<0xFF800000> : vector<4x64xf32>
    %5 = vector.multi_reduction <maximumf>, %4, %cst_3 [1] : vector<4x8x64xf32> to vector<4x64xf32>
    %6 = vector.shape_cast %5 : vector<4x64xf32> to vector<4x1x64xf32>
    %7 = vector.broadcast %6 : vector<4x1x64xf32> to vector<4x8x64xf32>
    %8 = arith.subf %4, %7 : vector<4x8x64xf32>
    %9 = math.exp %8 : vector<4x8x64xf32>
    %cst_4 = arith.constant dense<0.000000e+00> : vector<4x64xf32>
    %10 = vector.multi_reduction <add>, %9, %cst_4 [1] : vector<4x8x64xf32> to vector<4x64xf32>
    %11 = vector.shape_cast %10 : vector<4x64xf32> to vector<4x1x64xf32>
    %12 = tpu.reciprocal %11 {approx = true} : vector<4x1x64xf32> -> vector<4x1x64xf32>
    %13 = vector.broadcast %12 : vector<4x1x64xf32> to vector<4x8x64xf32>
    %14 = arith.mulf %9, %13 : vector<4x8x64xf32>
    %cst_5 = arith.constant dense<0.000000e+00> : vector<4x8xf32>
    %15 = vector.multi_reduction <add>, %14, %cst_5 [2] : vector<4x8x64xf32> to vector<4x8xf32>
    %16 = vector.shape_cast %15 : vector<4x8xf32> to vector<4x8x1xf32>
    %cst_6 = arith.constant 9.99999996E-13 : f32
    %17 = vector.broadcast %cst_6 : f32 to vector<4x8x1xf32>
    %18 = arith.maximumf %16, %17 : vector<4x8x1xf32>
    %19 = vector.broadcast %18 : vector<4x8x1xf32> to vector<4x8x64xf32>
    %20 = arith.divf %14, %19 : vector<4x8x64xf32>
    %21 = vector.shape_cast %20 : vector<4x8x64xf32> to vector<32x64xf32>
    %22 = arith.truncf %21 : vector<32x64xf32> to vector<32x64xbf16>
    %c0_7 = arith.constant 0 : index
    %c0_8 = arith.constant 0 : index
    %23 = vector.load %arg3[%c0_7, %c0_8] : memref<64x128xbf16, #tpu.memory_space<vmem>>, vector<64x128xbf16>
    %cst_9 = arith.constant dense<0.000000e+00> : vector<32x128xf32>
    %24 = tpu.matmul %22, %23, %cst_9 {dimension_numbers = #tpu.dot_dimension_numbers<[1], [0], [0], [1], [0, 0, 1, 1], [], []>} : vector<32x64xbf16>, vector<64x128xbf16>, vector<32x128xf32> -> vector<32x128xf32>
    %c0_10 = arith.constant 0 : index
    %c0_11 = arith.constant 0 : index
    %25 = vector.load %arg4[%c0_10, %c0_11] : memref<32x128xf32, #tpu.memory_space<vmem>>, vector<32x128xf32>
    tpu.vector_store %arg4[%c0_10, %c0_11], %24 {strides = array<i32>} : memref<32x128xf32, #tpu.memory_space<vmem>>, vector<32x128xf32>,
    return
  }
  func.func @transform_0(%arg0: i32) -> (i32, i32) {
    %c0_i32 = arith.constant 0 : i32
    %c0_i32_0 = arith.constant 0 : i32
    return %arg0, %c0_i32 : i32, i32
  }
  func.func @transform_1(%arg0: i32) -> (i32, i32) {
    %c0_i32 = arith.constant 0 : i32
    %c0_i32_0 = arith.constant 0 : i32
    %c0_i32_1 = arith.constant 0 : i32
    return %c0_i32, %c0_i32_0 : i32, i32
  }
  func.func @transform_2(%arg0: i32) -> (i32, i32) {
    %c0_i32 = arith.constant 0 : i32
    %c0_i32_0 = arith.constant 0 : i32
    %c0_i32_1 = arith.constant 0 : i32
    return %c0_i32, %c0_i32_0 : i32, i32
  }
  func.func @transform_3(%arg0: i32) -> (i32, i32) {
    %c0_i32 = arith.constant 0 : i32
    %c0_i32_0 = arith.constant 0 : i32
    return %arg0, %c0_i32 : i32, i32
  }
}

</mosaic_0001>

<llo_original>
// kernel: tpu_custom_call.1
$region0: #{tpu_custom_call.1}
  #allocation0 [shape = 'u32[]', space=smem, size = 0x4, offset = 0x4, fixed_abs, tag = 'smem constant byte address 0x4 - core index']
  #allocation1 [shape = 'u32[144,128]{1,0:T(1,128)}', space=vmem, size = 0x12000, scoped, tag = 'internal scratch']
  %s0 = inlined_call_operand.vmem [shape: f32[32,128], index: 0, kind: input, shape index: {}]
  %s1 = inlined_call_operand.vmem [shape: bf16[128,64], index: 1, kind: input, shape index: {}]
  %s2 = inlined_call_operand.vmem [shape: bf16[64,128], index: 2, kind: input, shape index: {}]
  %s3 = inlined_call_operand.hbm [shape: f32[32,128], index: 3, kind: output, shape index: {}]
  %s4 = sld [smem:[#allocation0]]
  $region22: #{tpu_custom_call.1} parent=0
    _
  %s6 = ssub.s32 1, %s4
  %s7 = scalar_select 0, %s6, %s4
  $region1: #{tpu_custom_call.1} parent=0
    #allocation2 [shape = 'u8[16384]{0}', space=vmem, size = 0x4000, scoped, tag = 'output window, operand 0, single buffered']
    #allocation3 [shape = 's32[1]{0}', space=sflag, size = 0x4, scoped, tag = 'scoped memory for tpu_custom_call.1']
    %8 = vsyncpa [#allocation3], 0
    // Predicated region
    $region2: #{tpu_custom_call.1} parent=1 // pred_check
      _
    $region3: #{tpu_custom_call.1} parent=1 // pred_check_branch
      %10 = sbr.rel (0) target = $region5
    $region4: #{tpu_custom_call.1} parent=1 // pred_region
      _
    $region5: #{tpu_custom_call.1} parent=1 // pred_fallthru
      _
    // Predicated region
    $region6: #{tpu_custom_call.1} parent=1 // pred_check
      _
    $region7: #{tpu_custom_call.1} parent=1 // pred_check_branch
      %12 = sbr.rel (0) target = $region9
    $region8: #{tpu_custom_call.1} parent=1 // pred_region
      _
    $region9: #{tpu_custom_call.1} parent=1 // pred_fallthru
      _
    // Predicated region
    $region10: #{tpu_custom_call.1} parent=1 // pred_check
      _
    $region11: #{tpu_custom_call.1} parent=1 // pred_check_branch
      %14 = sbr.rel (0) target = $region13
    $region12: #{tpu_custom_call.1} parent=1 // pred_region
      _
    $region13: #{tpu_custom_call.1} parent=1 // pred_fallthru
      _
    %v16 = vld [vmem:[%s0] sm:$0xff]
    %v17 = vld [vmem:[%s0 + $0x8] sm:$0xff]
    %v18 = vld [vmem:[%s0 + $0x10] sm:$0xff]
    %v19 = vld [vmem:[%s0 + $0x18] sm:$0xff]
    %v20 = vpack.c.bf16 %v17, %v16
    %v21 = vpack.c.bf16 %v19, %v18
    %v22 = vld [vmem:[%s1] sm:$0xf]
    %v23 = vld [vmem:[%s1 + $0x4] sm:$0xf]
    %v24 = vld [vmem:[%s1 + $0x8] sm:$0xf]
    %v25 = vld [vmem:[%s1 + $0xc] sm:$0xf]
    %v26 = vld [vmem:[%s1 + $0x10] sm:$0xf]
    %v27 = vld [vmem:[%s1 + $0x14] sm:$0xf]
    %v28 = vld [vmem:[%s1 + $0x18] sm:$0xf]
    %v29 = vld [vmem:[%s1 + $0x1c] sm:$0xf]
    %v30 = vld [vmem:[%s1 + $0x20] sm:$0xf]
    %v31 = vld [vmem:[%s1 + $0x24] sm:$0xf]
    %v32 = vld [vmem:[%s1 + $0x28] sm:$0xf]
    %v33 = vld [vmem:[%s1 + $0x2c] sm:$0xf]
    %v34 = vld [vmem:[%s1 + $0x30] sm:$0xf]
    %v35 = vld [vmem:[%s1 + $0x34] sm:$0xf]
    %v36 = vld [vmem:[%s1 + $0x38] sm:$0xf]
    %v37 = vld [vmem:[%s1 + $0x3c] sm:$0xf]
    %v54 = vunpack.c.l.b16 %v22
    %v55 = vunpack.c.l.b16 %v23
    %v56 = vunpack.c.l.b16 %v24
    %v57 = vunpack.c.l.b16 %v25
    %v58 = vunpack.c.l.b16 %v26
    %v59 = vunpack.c.l.b16 %v27
    %v60 = vunpack.c.l.b16 %v28
    %v61 = vunpack.c.l.b16 %v29
    %v62 = vunpack.c.l.b16 %v30
    %v63 = vunpack.c.l.b16 %v31
    %v64 = vunpack.c.l.b16 %v32
    %v65 = vunpack.c.l.b16 %v33
    %v66 = vunpack.c.l.b16 %v34
    %v67 = vunpack.c.l.b16 %v35
    %v68 = vunpack.c.l.b16 %v36
    %v69 = vunpack.c.l.b16 %v37
    %v70 = vpack.c.b16 %v55, %v54
    %v71 = vpack.c.b16 %v57, %v56
    %v72 = vpack.c.b16 %v59, %v58
    %v73 = vpack.c.b16 %v61, %v60
    %v74 = vpack.c.b16 %v63, %v62
    %v75 = vpack.c.b16 %v65, %v64
    %v76 = vpack.c.b16 %v67, %v66
    %v77 = vpack.c.b16 %v69, %v68
    %86 = vmatprep.subr.bf16.mxu0 0
    %87 = vmatpush1.bf16.msra.mxu0 %v70
    %88 = vmatprep.subr.bf16.mxu0 0
    %89 = vmatpush1.bf16.msra.mxu0 %v71
    %90 = vmatprep.subr.bf16.mxu0 0
    %91 = vmatpush1.bf16.msra.mxu0 %v72
    %92 = vmatprep.subr.bf16.mxu0 0
    %93 = vmatpush1.bf16.msra.mxu0 %v73
    %94 = vmatprep.subr.bf16.mxu0 0
    %95 = vmatpush1.bf16.msra.mxu0 %v74
    %96 = vmatprep.subr.bf16.mxu0 0
    %97 = vmatpush1.bf16.msra.mxu0 %v75
    %98 = vmatprep.subr.bf16.mxu0 0
    %99 = vmatpush1.bf16.msra.mxu0 %v76
    %100 = vmatprep.subr.bf16.mxu0 0
    %101 = vmatpush1.bf16.msra.mxu0 %v77
    %102 = vmatprep.subr.bf16.mxu0 0
    %103 = vmatpush1.bf16.msra.mxu0 0
    %104 = vmatprep.subr.bf16.mxu0 0
    %105 = vmatpush1.bf16.msra.mxu0 0
    %106 = vmatprep.subr.bf16.mxu0 0
    %107 = vmatpush1.bf16.msra.mxu0 0
    %108 = vmatprep.subr.bf16.mxu0 0
    %109 = vmatpush1.bf16.msra.mxu0 0
    %110 = vmatprep.subr.bf16.mxu0 0
    %111 = vmatpush1.bf16.msra.mxu0 0
    %112 = vmatprep.subr.bf16.mxu0 0
    %113 = vmatpush1.bf16.msra.mxu0 0
    %114 = vmatprep.subr.bf16.mxu0 0
    %115 = vmatpush1.bf16.msra.mxu0 0
    %116 = vmatprep.subr.bf16.mxu0 0
    %117 = vmatpush1.bf16.msra.mxu0 0
    %118 = vmatprep.mubr.bf16.mxu0 0
    %119 = vmatmul.mubr.bf16.gmra.mrb[0].mxu0 %v20
    %v120 = vpop.f32.mrb[0].mxu0
    %v121 = vadd.f32 0.0, %v120
    %v122 = vpop.f32.mrb[0].mxu0
    %v123 = vpop.f32.mrb[0].mxu0
    %v124 = vadd.f32 0.0, %v123
    %v125 = vpop.f32.mrb[0].mxu0
    %126 = vmatprep.mubr.bf16.mxu0 0
    %127 = vmatmul.mubr.bf16.gmra.mrb[0].mxu0 %v21
    %v128 = vpop.f32.mrb[0].mxu0
    %v129 = vadd.f32 0.0, %v128
    %v130 = vpop.f32.mrb[0].mxu0
    %v131 = vpop.f32.mrb[0].mxu0
    %v132 = vadd.f32 0.0, %v131
    %v133 = vpop.f32.mrb[0].mxu0
    %134 = vdwg.mxu0
    %vm135 = vcmask 523264
    %v136 = vsel %vm135, %v121, -inf
    %v137 = vrot.slane %v136, 4
    %v138 = vmax.f32 %v136, %v137
    %v139 = vrot.slane %v138, 2
    %v140 = vmax.f32 %v138, %v139
    %v141 = vrot.slane %v140, 1
    %v142 = vmax.f32 %v140, %v141
    %v143 = vsel %vm135, %v124, -inf
    %v144 = vrot.slane %v143, 4
    %v145 = vmax.f32 %v143, %v144
    %v146 = vrot.slane %v145, 2
    %v147 = vmax.f32 %v145, %v146
    %v148 = vrot.slane %v147, 1
    %v149 = vmax.f32 %v147, %v148
    %v150 = vsel %vm135, %v129, -inf
    %v151 = vrot.slane %v150, 4
    %v152 = vmax.f32 %v150, %v151
    %v153 = vrot.slane %v152, 2
    %v154 = vmax.f32 %v152, %v153
    %v155 = vrot.slane %v154, 1
    %v156 = vmax.f32 %v154, %v155
    %v157 = vsel %vm135, %v132, -inf
    %v158 = vrot.slane %v157, 4
    %v159 = vmax.f32 %v157, %v158
    %v160 = vrot.slane %v159, 2
    %v161 = vmax.f32 %v159, %v160
    %v162 = vrot.slane %v161, 1
    %v163 = vmax.f32 %v161, %v162
    %v164 = vsub.f32 %v121, %v142
    %v165 = vsub.f32 %v124, %v149
    %v166 = vsub.f32 %v129, %v156
    %v167 = vsub.f32 %v132, %v163
    %v168 = vmul.f32 %v164, 1.442695
    %v169 = vpow.pop %v168
    %v170 = vmul.f32 %v165, 1.442695
    %v171 = vpow.pop %v170
    %v172 = vmul.f32 %v166, 1.442695
    %v173 = vpow.pop %v172
    %v174 = vmul.f32 %v167, 1.442695
    %v175 = vpow.pop %v174
    %v176 = vsel %vm135, %v169, 0.0
    %v177 = vrot.slane %v176, 4
    %v178 = vadd.f32 %v176, %v177
    %v179 = vrot.slane %v178, 2
    %v180 = vadd.f32 %v178, %v179
    %v181 = vrot.slane %v180, 1
    %v182 = vadd.f32 %v180, %v181
    %v183 = vsel %vm135, %v171, 0.0
    %v184 = vrot.slane %v183, 4
    %v185 = vadd.f32 %v183, %v184
    %v186 = vrot.slane %v185, 2
    %v187 = vadd.f32 %v185, %v186
    %v188 = vrot.slane %v187, 1
    %v189 = vadd.f32 %v187, %v188
    %v190 = vsel %vm135, %v173, 0.0
    %v191 = vrot.slane %v190, 4
    %v192 = vadd.f32 %v190, %v191
    %v193 = vrot.slane %v192, 2
    %v194 = vadd.f32 %v192, %v193
    %v195 = vrot.slane %v194, 1
    %v196 = vadd.f32 %v194, %v195
    %v197 = vsel %vm135, %v175, 0.0
    %v198 = vrot.slane %v197, 4
    %v199 = vadd.f32 %v197, %v198
    %v200 = vrot.slane %v199, 2
    %v201 = vadd.f32 %v199, %v200
    %v202 = vrot.slane %v201, 1
    %v203 = vadd.f32 %v201, %v202
    %v204 = vrcp.pop %v182
    %v205 = vrcp.pop %v189
    %v206 = vrcp.pop %v196
    %v207 = vrcp.pop %v203
    %v208 = vmul.f32 %v169, %v204
    %v209 = vmul.f32 %v171, %v205
    %v210 = vmul.f32 %v173, %v206
    %v211 = vmul.f32 %v175, %v207
    %v212 = vsel %vm135, %v208, 0.0
    %213 = vadd.xlane.f32.xlu0 %v212
    %v214 = vpop.xlane.xlu0 %213
    %v215 = vsel %vm135, %v209, 0.0
    %216 = vadd.xlane.f32.xlu0 %v215
    %v217 = vpop.xlane.xlu0 %216
    %v218 = vsel %vm135, %v210, 0.0
    %219 = vadd.xlane.f32.xlu0 %v218
    %v220 = vpop.xlane.xlu0 %219
    %v221 = vsel %vm135, %v211, 0.0
    %222 = vadd.xlane.f32.xlu0 %v221
    %v223 = vpop.xlane.xlu0 %222
    %v224 = vmax.f32 %v214, 1e-12
    %v225 = vmax.f32 %v217, 1e-12
    %v226 = vmax.f32 %v220, 1e-12
    %v227 = vmax.f32 %v223, 1e-12
    %v228 = vrcp.pop %v224
    %v229 = vmul.f32 %v208, %v228
    %v230 = vrcp.pop %v225
    %v231 = vmul.f32 %v209, %v230
    %v232 = vrcp.pop %v226
    %v233 = vmul.f32 %v210, %v232
    %v234 = vrcp.pop %v227
    %v235 = vmul.f32 %v211, %v234
    %v236 = vpack.c.bf16 %v231, %v229
    %v237 = vpack.c.bf16 %v235, %v233
    %v238 = vld [vmem:[%s2] sm:$0xf]
    %v239 = vld [vmem:[%s2 + $0x4] sm:$0xf]
    %v240 = vld [vmem:[%s2 + $0x8] sm:$0xf]
    %v241 = vld [vmem:[%s2 + $0xc] sm:$0xf]
    %v242 = vld [vmem:[%s2 + $0x10] sm:$0xf]
    %v243 = vld [vmem:[%s2 + $0x14] sm:$0xf]
    %v244 = vld [vmem:[%s2 + $0x18] sm:$0xf]
    %v245 = vld [vmem:[%s2 + $0x1c] sm:$0xf]
    %v254 = vunpack.c.l.b16 %v238
    %v255 = vunpack.c.l.b16 %v239
    %v256 = vunpack.c.l.b16 %v240
    %v257 = vunpack.c.l.b16 %v241
    %v258 = vunpack.c.l.b16 %v242
    %v259 = vunpack.c.l.b16 %v243
    %v260 = vunpack.c.l.b16 %v244
    %v261 = vunpack.c.l.b16 %v245
    %v262 = vpack.c.b16 %v255, %v254
    %v263 = vpack.c.b16 %v257, %v256
    %v264 = vpack.c.b16 %v259, %v258
    %v265 = vpack.c.b16 %v261, %v260
    %v271 = vsel %vm135, %v236, 0
    %v274 = vsel %vm135, %v237, 0
    %276 = vmatprep.subr.bf16.mxu0 0
    %277 = vmatpush1.bf16.msra.mxu0 %v262
    %278 = vmatprep.subr.bf16.mxu0 0
    %279 = vmatpush1.bf16.msra.mxu0 %v263
    %280 = vmatprep.subr.bf16.mxu0 0
    %281 = vmatpush1.bf16.msra.mxu0 %v264
    %282 = vmatprep.subr.bf16.mxu0 0
    %283 = vmatpush1.bf16.msra.mxu0 %v265
    %284 = vmatprep.subr.bf16.mxu0 0
    %285 = vmatpush1.bf16.msra.mxu0 0
    %286 = vmatprep.subr.bf16.mxu0 0
    %287 = vmatpush1.bf16.msra.mxu0 0
    %288 = vmatprep.subr.bf16.mxu0 0
    %289 = vmatpush1.bf16.msra.mxu0 0
    %290 = vmatprep.subr.bf16.mxu0 0
    %291 = vmatpush1.bf16.msra.mxu0 0
    %292 = vmatprep.subr.bf16.mxu0 0
    %293 = vmatpush1.bf16.msra.mxu0 0
    %294 = vmatprep.subr.bf16.mxu0 0
    %295 = vmatpush1.bf16.msra.mxu0 0
    %296 = vmatprep.subr.bf16.mxu0 0
    %297 = vmatpush1.bf16.msra.mxu0 0
    %298 = vmatprep.subr.bf16.mxu0 0
    %299 = vmatpush1.bf16.msra.mxu0 0
    %300 = vmatprep.subr.bf16.mxu0 0
    %301 = vmatpush1.bf16.msra.mxu0 0
    %302 = vmatprep.subr.bf16.mxu0 0
    %303 = vmatpush1.bf16.msra.mxu0 0
    %304 = vmatprep.subr.bf16.mxu0 0
    %305 = vmatpush1.bf16.msra.mxu0 0
    %306 = vmatprep.subr.bf16.mxu0 0
    %307 = vmatpush1.bf16.msra.mxu0 0
    %308 = vmatprep.mubr.bf16.mxu0 0
    %309 = vmatmul.mubr.bf16.gmra.mrb[0].mxu0 %v271
    %v310 = vpop.f32.mrb[0].mxu0
    %v311 = vadd.f32 0.0, %v310
    %v312 = vpop.f32.mrb[0].mxu0
    %v313 = vpop.f32.mrb[0].mxu0
    %v314 = vadd.f32 0.0, %v313
    %v315 = vpop.f32.mrb[0].mxu0
    %316 = vmatprep.mubr.bf16.mxu0 0
    %317 = vmatmul.mubr.bf16.gmra.mrb[0].mxu0 %v274
    %v318 = vpop.f32.mrb[0].mxu0
    %v319 = vadd.f32 0.0, %v318
    %v320 = vpop.f32.mrb[0].mxu0
    %v321 = vpop.f32.mrb[0].mxu0
    %v322 = vadd.f32 0.0, %v321
    %v323 = vpop.f32.mrb[0].mxu0
    %324 = vdwg.mxu0
    %325 = vst [vmem:[#allocation2] sm:$0xff] %v311
    %326 = vst [vmem:[#allocation2 + $0x8] sm:$0xff] %v314
    %327 = vst [vmem:[#allocation2 + $0x10] sm:$0xff] %v319
    %328 = vst [vmem:[#allocation2 + $0x18] sm:$0xff] %v322
    // Predicated region
    $region14: #{tpu_custom_call.1} parent=1 // pred_check
      _
    $region15: #{tpu_custom_call.1} parent=1 // pred_check_branch
      %330 = sbr.rel (0) target = $region17
    $region16: #{tpu_custom_call.1} parent=1 // pred_region
      %s332 = ssub.s32 512, 512
      %333 = vsyncadd [#allocation3], %s332
      %s334 = sshll.u32 [#allocation2], 4
      %s335 = int_to_ptr.vmem [resolvable:$true] %s334
      %340 = dma.vmem_to_hbm [thread:$0]  %s335, 512, %s3, [#allocation3], 128, 128, 8
    $region17: #{tpu_custom_call.1} parent=1 // pred_fallthru
      _
    // Predicated region
    $region18: #{tpu_custom_call.1} parent=1 // pred_check
      _
    $region19: #{tpu_custom_call.1} parent=1 // pred_check_branch
      %342 = sbr.rel (0) target = $region21
    $region20: #{tpu_custom_call.1} parent=1 // pred_region
      %343 = dma.done [#allocation3], 512
    $region21: #{tpu_custom_call.1} parent=1 // pred_fallthru
      _
    %344 = vsyncpa [#allocation3], 1

</llo_original>
